<compile_context>
chip_gen: v5e
topology: v5e:2x2
jax: 0.10.0
libtpu: 0.0.40
codegen_flags: <defaults>
</compile_context>

<pallas_src>
import numpy as np
import jax
import jax.numpy as jnp
from jax import lax
from jax.experimental import pallas as pl
from jax.experimental.pallas import tpu as pltpu


def _round_up(x, m):
    return ((x + m - 1) // m) * m


def _vmem_capacity_bytes():
    """Per-TensorCore VMEM capacity; conservative fallback (v7x = 64 MiB)."""
    try:
        info = pltpu.get_tpu_info()
        cap = int(getattr(info, "vmem_capacity_bytes", 0) or 0)
        if cap > 0:
            return cap
    except Exception:
        pass
    return 64 * 1024 * 1024


def _step_vmem_bytes(bb, tl, pad, c_in_p, c_out_p, k):
    """f32 VMEM footprint of one grid step (double-buffered blocks + scratch)."""
    t1 = tl + pad
    h = 2 * pad
    blocks = bb * (c_in_p * tl + c_in_p * h + c_out_p * tl)          # x + halo + out
    weights = (2 * c_out_p) * (k * c_in_p) + 2 * c_out_p + k * c_out_p * c_out_p + c_out_p
    scratch = k * c_in_p * t1 + 2 * c_out_p * t1                     # col1 + out1/res
    return 4 * (2 * blocks + 2 * weights + scratch)


def _choose_tiling(B, L, pad, c_in_p, c_out_p, k, budget, l_tile=None):
    """Largest lane-dense L-tile that fits the budget, then grow the batch block."""
    h = 2 * pad
    if l_tile is not None:
        assert L % l_tile == 0 and (L == l_tile or l_tile >= h), "bad l_tile override"
        cands = [l_tile]
    else:
        cands = sorted({t for t in (4096, 2048, 1024, 512, 256, 128)
                        if L % t == 0 and t >= h} | {L}, reverse=True)
    tl = cands[-1]
    for c in cands:                                   # biggest tile that fits
        if _step_vmem_bytes(1, c, pad, c_in_p, c_out_p, k) <= budget:
            tl = c
            break
    bb = 1
    for c in (8, 4, 2):                               # fold batches if it still fits
        if B % c == 0 and _step_vmem_bytes(c, tl, pad, c_in_p, c_out_p, k) <= budget:
            bb = c
            break
    return tl, L // tl, bb


def _make_kernel(C_in_p, C_out_p, K, DIL, PAD, TL, Bb, n_lt):
    T1 = TL + PAD          # conv1 output columns needed for conv2 on this tile

    def kernel(x_ref, halo_ref, w1d_ref, b1d_ref, w2_ref, b2_ref, o_ref,
               col1_ref, out1_ref):
        last = pl.program_id(1) == (n_lt - 1)

        for bb in range(Bb):                                     # static unroll
            # ---- conv1 im2col (K*C_in_p, T1): shifted ref-slice copies ----
            # Columns past the x tile come from the precomputed right-halo input.
            for j in range(K):                                   # static unroll
                r0, s = j * C_in_p, j * DIL
                w = max(TL - s, 0)                               # columns from x tile
                if w > 0:
                    col1_ref[r0:r0 + C_in_p, 0:w] = x_ref[bb, :, s:s + w]
                h0 = w + s - TL                                  # halo start offset >= 0
                col1_ref[r0:r0 + C_in_p, w:T1] = halo_ref[bb, 0, :, h0:h0 + (T1 - w)]

            # ---- fused conv1 + 1x1 downsample: ONE MXU matmul ----
            # rows [0:C_out_p]          -> conv1 (all T1 columns, relu applied)
            # rows [C_out_p:2*C_out_p]  -> 1x1 downsample residual (first TL cols)
            # TODO(synk): cast operands to bf16 on v6e/v7x when MXU-bound (large C).
            fused = jnp.dot(w1d_ref[...], col1_ref[...],
                            preferred_element_type=jnp.float32) + b1d_ref[...]
            out1_ref[0:C_out_p, :] = jnp.maximum(fused[0:C_out_p, :], 0.0)
            out1_ref[C_out_p:2 * C_out_p, 0:TL] = fused[C_out_p:2 * C_out_p, 0:TL]
            # dropout1: identity in eval mode.
            # TODO(synk): training-mode dropout would use pltpu.prng_* in-kernel.

            # conv1 has no valid output past position L+PAD-1: zero those PAD
            # columns (only the last tile reaches past the end of the sequence).
            @pl.when(last)
            def _zero_tail():
                out1_ref[0:C_out_p, TL:T1] = jnp.zeros((C_out_p, PAD), jnp.float32)

            # ---- conv2: K accumulated MXU dots (no im2col materialization) ----
            acc = jnp.dot(w2_ref[0], out1_ref[0:C_out_p, 0:TL],
                          preferred_element_type=jnp.float32)
            for j in range(1, K):
                s = j * DIL
                acc = acc + jnp.dot(w2_ref[j], out1_ref[0:C_out_p, s:s + TL],
                                    preferred_element_type=jnp.float32)
            out2 = jnp.maximum(acc + b2_ref[...], 0.0)
            # dropout2: identity in eval mode.

            # ---- residual add + final relu (lane-dense store) ----
            o_ref[bb] = jnp.maximum(out2 + out1_ref[C_out_p:2 * C_out_p, 0:TL], 0.0)

    return kernel


def temporal_block(x, w1, b1, w2, b2, wd, bd, *, kernel_size, dilation, l_tile=None):
    """TemporalBlock forward (eval mode), PyTorch NCL layout end to end.

    x : (B, C_in, L);  w1: (C_out, C_in, K);  w2: (C_out, C_out, K);
    wd: (C_out, C_in, 1) (1x1 downsample);  b1/b2/bd: (C_out,).
    """
    B, C_in, L = x.shape
    C_out = w1.shape[0]
    K, DIL = int(kernel_size), int(dilation)
    PAD = (K - 1) * DIL
    if PAD == 0:
        # TODO(synk): kernel_size == 1 (pointwise) path not implemented.
        raise NotImplementedError("kernel_size must be >= 2")

    f32 = jnp.float32
    C_in_p, C_out_p = _round_up(C_in, 8), _round_up(C_out, 8)

    cap = _vmem_capacity_bytes()
    budget = min(cap // 2, cap - (24 << 20))            # generation-aware tile budget
    TL, n_lt, Bb = _choose_tiling(B, L, PAD, C_in_p, C_out_p, K, budget, l_tile)
    T1, H = TL + PAD, 2 * PAD

    # ---- wrapper-side layout prep (channel pad to multiples of 8; fused weights) --
    xf = jnp.pad(x.astype(f32), ((0, 0), (0, C_in_p - C_in), (0, 0)))
    w1p = jnp.pad(w1.astype(f32), ((0, C_out_p - C_out), (0, C_in_p - C_in), (0, 0)))
    w2p = jnp.pad(w2.astype(f32), ((0, C_out_p - C_out), (0, C_out_p - C_out), (0, 0)))
    wdp = jnp.pad(wd[:, :, 0].astype(f32), ((0, C_out_p - C_out), (0, C_in_p - C_in)))
    b1p = jnp.pad(b1.astype(f32), (0, C_out_p - C_out))
    b2p = jnp.pad(b2.astype(f32), (0, C_out_p - C_out))
    bdp = jnp.pad(bd.astype(f32), (0, C_out_p - C_out))

    # Fused conv1 + downsample weight: (2*C_out_p, K*C_in_p); wd lives in the
    # tap-0 column block of the bottom C_out_p rows, zeros elsewhere.
    w1f = jnp.transpose(w1p, (0, 2, 1)).reshape(C_out_p, K * C_in_p)
    wdf = jnp.concatenate([wdp, jnp.zeros((C_out_p, (K - 1) * C_in_p), f32)], axis=1)
    w1d = jnp.concatenate([w1f, wdf], axis=0)
    b1d = jnp.concatenate([b1p, bdp]).reshape(2 * C_out_p, 1)
    w2t = jnp.transpose(w2p, (2, 0, 1))                  # (K, C_out_p, C_out_p) per-tap
    b2c = b2p.reshape(C_out_p, 1)

    # Right-halo strips per L-tile: x columns [(t+1)*TL, (t+1)*TL + 2*PAD),
    # zero past L.  Removes the serial cross-tile scratch carry.
    xr = jnp.pad(xf, ((0, 0), (0, 0), (0, H)))
    halos = jnp.stack([lax.slice_in_dim(xr, (t + 1) * TL, (t + 1) * TL + H, axis=2)
                       for t in range(n_lt)], axis=1)    # (B, n_lt, C_in_p, H)

    kernel = _make_kernel(C_in_p, C_out_p, K, DIL, PAD, TL, Bb, n_lt)

    flops = int(2 * B * L * (2 * C_out_p * K * C_in_p + K * C_out_p * C_out_p))
    bytes_accessed = int(4 * (B * L * (C_in_p + C_out_p) + B * n_lt * C_in_p * H
                              + 2 * C_out_p * K * C_in_p + K * C_out_p * C_out_p
                              + 3 * C_out_p))
    fp = _step_vmem_bytes(Bb, TL, PAD, C_in_p, C_out_p, K)
    vmem_limit = int(min(cap * 3 // 4, max(fp + (8 << 20), 32 << 20)))

    out = pl.pallas_call(
        kernel,
        out_shape=jax.ShapeDtypeStruct((B, C_out_p, L), f32),
        grid_spec=pltpu.PrefetchScalarGridSpec(
            num_scalar_prefetch=0,
            grid=(B // Bb, n_lt),
            in_specs=[
                pl.BlockSpec((Bb, C_in_p, TL), lambda b, t: (b, 0, t)),        # x
                pl.BlockSpec((Bb, 1, C_in_p, H), lambda b, t: (b, t, 0, 0)),   # right halo
                pl.BlockSpec((2 * C_out_p, K * C_in_p), lambda b, t: (0, 0)),  # w1+wd fused
                pl.BlockSpec((2 * C_out_p, 1), lambda b, t: (0, 0)),           # b1+bd
                pl.BlockSpec((K, C_out_p, C_out_p), lambda b, t: (0, 0, 0)),   # w2 per-tap
                pl.BlockSpec((C_out_p, 1), lambda b, t: (0, 0)),               # b2
            ],
            out_specs=pl.BlockSpec((Bb, C_out_p, TL), lambda b, t: (b, 0, t)),
            scratch_shapes=[
                pltpu.VMEM((K * C_in_p, T1), f32),       # conv1 im2col
                pltpu.VMEM((2 * C_out_p, T1), f32),      # relu(conv1) rows + residual rows
            ],
        ),
        compiler_params=pltpu.CompilerParams(
            dimension_semantics=("parallel", "parallel"),
            vmem_limit_bytes=vmem_limit,
        ),
        cost_estimate=pl.CostEstimate(flops=flops, transcendentals=0,
                                      bytes_accessed=bytes_accessed),
    )(xf, halos, w1d, b1d, w2t, b2c)

    return out[:, :C_out, :] if C_out_p != C_out else out


def _ref_forward(x, w1, b1, w2, b2, wd, bd, kernel_size, dilation):
    """Pure-JAX reference matching the PyTorch module in eval mode."""
    pad = (kernel_size - 1) * dilation
    dn = ("NCH", "OIH", "NCH")
    prec = lax.Precision.HIGHEST
    out = lax.conv_general_dilated(x, w1, (1,), [(pad, pad)],
                                   rhs_dilation=(dilation,),
                                   dimension_numbers=dn, precision=prec)
    out = jax.nn.relu(out + b1[None, :, None])
    out = lax.conv_general_dilated(out, w2, (1,), [(pad, pad)],
                                   rhs_dilation=(dilation,),
                                   dimension_numbers=dn, precision=prec)
    out = jax.nn.relu(out + b2[None, :, None])
    res = lax.conv_general_dilated(x, wd, (1,), [(0, 0)],
                                   dimension_numbers=dn, precision=prec)
    res = res + bd[None, :, None]
    out_trim = out[:, :, 2 * pad:]
    res_trim = res[:, :, : out_trim.shape[2]]
    return jax.nn.relu(out_trim + res_trim)


def _run_case(key, B, C_in, C_out, L, K, DIL, l_tile=None):
    ks = jax.random.split(key, 7)
    # kaiming_normal_: std = sqrt(2 / fan_in)
    w1 = jax.random.normal(ks[0], (C_out, C_in, K), jnp.float32) * np.sqrt(2.0 / (C_in * K))
    w2 = jax.random.normal(ks[1], (C_out, C_out, K), jnp.float32) * np.sqrt(2.0 / (C_out * K))
    wd = jax.random.normal(ks[2], (C_out, C_in, 1), jnp.float32) * np.sqrt(2.0 / C_in)
    # PyTorch Conv1d default bias init: U(-1/sqrt(fan_in), 1/sqrt(fan_in))
    b1 = jax.random.uniform(ks[3], (C_out,), jnp.float32, -1.0, 1.0) / np.sqrt(C_in * K)
    b2 = jax.random.uniform(ks[4], (C_out,), jnp.float32, -1.0, 1.0) / np.sqrt(C_out * K)
    bd = jax.random.uniform(ks[5], (C_out,), jnp.float32, -1.0, 1.0) / np.sqrt(C_in)
    x = jax.random.normal(ks[6], (B, C_in, L), jnp.float32)

    out = temporal_block(x, w1, b1, w2, b2, wd, bd,
                         kernel_size=K, dilation=DIL, l_tile=l_tile)
    out = jax.block_until_ready(out)

    ref = _ref_forward(x, w1, b1, w2, b2, wd, bd, K, DIL)
    assert out.shape == ref.shape == (B, C_out, L), (out.shape, ref.shape)
    np.testing.assert_allclose(np.asarray(out), np.asarray(ref), rtol=1e-4, atol=2e-4)


if __name__ == "__main__":
    key = jax.random.PRNGKey(0)
    k1, k2, k3 = jax.random.split(key, 3)
    # Primary small case (single L-tile, channel-padding 4->8, batch block Bb=2).
    _run_case(k1, B=2, C_in=4, C_out=8, L=16, K=3, DIL=2)
    # Forced 2 L-tiles of 128: exercises the precomputed right-halo input path.
    _run_case(k2, B=2, C_in=4, C_out=8, L=256, K=3, DIL=4, l_tile=128)
    # Non-multiple-of-8 channels on both sides + K=2: exercises output slicing.
    _run_case(k3, B=2, C_in=3, C_out=6, L=128, K=2, DIL=1)
    print("KERNEL_OK")
</pallas_src>

<mosaic_0001>
module attributes {stable_mosaic.version = 11 : i64} {
  func.func @kernel(%arg0: i32, %arg1: i32, %arg2: memref<2x8x16xf32, #tpu.memory_space<vmem>>, %arg3: memref<2x1x8x8xf32, #tpu.memory_space<vmem>>, %arg4: memref<16x24xf32, #tpu.memory_space<vmem>>, %arg5: memref<16x1xf32, #tpu.memory_space<vmem>>, %arg6: memref<3x8x8xf32, #tpu.memory_space<vmem>>, %arg7: memref<8x1xf32, #tpu.memory_space<vmem>>, %arg8: memref<2x8x16xf32, #tpu.memory_space<vmem>>, %arg9: memref<24x20xf32, #tpu.memory_space<vmem>>, %arg10: memref<16x20xf32, #tpu.memory_space<vmem>>) attributes {dimension_semantics = [#tpu.dimension_semantics<parallel>, #tpu.dimension_semantics<parallel>], iteration_bounds = array<i64: 1, 1>, scalar_prefetch = 0 : i64, scratch_operands = 2 : i64, tpu.core_type = #tpu.core_type<tc>, window_params = [{transform_indices = @transform_0, window_bounds = array<i64: 2, 8, 16>}, {transform_indices = @transform_1, window_bounds = array<i64: 2, 1, 8, 8>}, {pipeline_mode = #tpu.pipeline_mode<synchronous>, transform_indices = @transform_2, window_bounds = array<i64: 16, 24>}, {pipeline_mode = #tpu.pipeline_mode<synchronous>, transform_indices = @transform_3, window_bounds = array<i64: 16, 1>}, {pipeline_mode = #tpu.pipeline_mode<synchronous>, transform_indices = @transform_4, window_bounds = array<i64: 3, 8, 8>}, {pipeline_mode = #tpu.pipeline_mode<synchronous>, transform_indices = @transform_5, window_bounds = array<i64: 8, 1>}, {transform_indices = @transform_6, window_bounds = array<i64: 2, 8, 16>}]} {
    %c0_i32 = arith.constant 0 : i32
    %0 = arith.cmpi eq, %arg1, %c0_i32 : i32
    %c0 = arith.constant 0 : index
    %c0_0 = arith.constant 0 : index
    %c0_1 = arith.constant 0 : index
    %1 = vector.load %arg2[%c0, %c0_0, %c0_1] : memref<2x8x16xf32, #tpu.memory_space<vmem>>, vector<1x8x16xf32>
    %2 = vector.shape_cast %1 : vector<1x8x16xf32> to vector<8x16xf32>
    %c0_2 = arith.constant 0 : index
    %c0_3 = arith.constant 0 : index
    %3 = vector.load %arg9[%c0_2, %c0_3] : memref<24x20xf32, #tpu.memory_space<vmem>>, vector<8x16xf32>
    tpu.vector_store %arg9[%c0_2, %c0_3], %2 {strides = array<i32>} : memref<24x20xf32, #tpu.memory_space<vmem>>, vector<8x16xf32>,
    %c0_4 = arith.constant 0 : index
    %c0_5 = arith.constant 0 : index
    %c0_6 = arith.constant 0 : index
    %c0_7 = arith.constant 0 : index
    %4 = vector.load %arg3[%c0_4, %c0_5, %c0_6, %c0_7] : memref<2x1x8x8xf32, #tpu.memory_space<vmem>>, vector<1x1x8x4xf32>
    %5 = vector.shape_cast %4 : vector<1x1x8x4xf32> to vector<8x4xf32>
    %c0_8 = arith.constant 0 : index
    %c16 = arith.constant 16 : index
    %6 = vector.load %arg9[%c0_8, %c16] : memref<24x20xf32, #tpu.memory_space<vmem>>, vector<8x4xf32>
    tpu.vector_store %arg9[%c0_8, %c16], %5 {strides = array<i32>} : memref<24x20xf32, #tpu.memory_space<vmem>>, vector<8x4xf32>,
    %c0_9 = arith.constant 0 : index
    %c0_10 = arith.constant 0 : index
    %c2 = arith.constant 2 : index
    %7 = vector.load %arg2[%c0_9, %c0_10, %c2] : memref<2x8x16xf32, #tpu.memory_space<vmem>>, vector<1x8x14xf32>
    %8 = vector.shape_cast %7 : vector<1x8x14xf32> to vector<8x14xf32>
    %c8 = arith.constant 8 : index
    %c0_11 = arith.constant 0 : index
    %9 = vector.load %arg9[%c8, %c0_11] : memref<24x20xf32, #tpu.memory_space<vmem>>, vector<8x14xf32>
    tpu.vector_store %arg9[%c8, %c0_11], %8 {strides = array<i32>} : memref<24x20xf32, #tpu.memory_space<vmem>>, vector<8x14xf32>,
    %c0_12 = arith.constant 0 : index
    %c0_13 = arith.constant 0 : index
    %c0_14 = arith.constant 0 : index
    %c0_15 = arith.constant 0 : index
    %10 = vector.load %arg3[%c0_12, %c0_13, %c0_14, %c0_15] : memref<2x1x8x8xf32, #tpu.memory_space<vmem>>, vector<1x1x8x6xf32>
    %11 = vector.shape_cast %10 : vector<1x1x8x6xf32> to vector<8x6xf32>
    %c8_16 = arith.constant 8 : index
    %c14 = arith.constant 14 : index
    %12 = vector.load %arg9[%c8_16, %c14] : memref<24x20xf32, #tpu.memory_space<vmem>>, vector<8x6xf32>
    tpu.vector_store %arg9[%c8_16, %c14], %11 {strides = array<i32>} : memref<24x20xf32, #tpu.memory_space<vmem>>, vector<8x6xf32>,
    %c0_17 = arith.constant 0 : index
    %c0_18 = arith.constant 0 : index
    %c4 = arith.constant 4 : index
    %13 = vector.load %arg2[%c0_17, %c0_18, %c4] : memref<2x8x16xf32, #tpu.memory_space<vmem>>, vector<1x8x12xf32>
    %14 = vector.shape_cast %13 : vector<1x8x12xf32> to vector<8x12xf32>
    %c16_19 = arith.constant 16 : index
    %c0_20 = arith.constant 0 : index
    %15 = vector.load %arg9[%c16_19, %c0_20] : memref<24x20xf32, #tpu.memory_space<vmem>>, vector<8x12xf32>
    tpu.vector_store %arg9[%c16_19, %c0_20], %14 {strides = array<i32>} : memref<24x20xf32, #tpu.memory_space<vmem>>, vector<8x12xf32>,
    %c0_21 = arith.constant 0 : index
    %c0_22 = arith.constant 0 : index
    %c0_23 = arith.constant 0 : index
    %c0_24 = arith.constant 0 : index
    %16 = vector.load %arg3[%c0_21, %c0_22, %c0_23, %c0_24] : memref<2x1x8x8xf32, #tpu.memory_space<vmem>>, vector<1x1x8x8xf32>
    %17 = vector.shape_cast %16 : vector<1x1x8x8xf32> to vector<8x8xf32>
    %c16_25 = arith.constant 16 : index
    %c12 = arith.constant 12 : index
    %18 = vector.load %arg9[%c16_25, %c12] : memref<24x20xf32, #tpu.memory_space<vmem>>, vector<8x8xf32>
    tpu.vector_store %arg9[%c16_25, %c12], %17 {strides = array<i32>} : memref<24x20xf32, #tpu.memory_space<vmem>>, vector<8x8xf32>,
    %c0_26 = arith.constant 0 : index
    %c0_27 = arith.constant 0 : index
    %19 = vector.load %arg4[%c0_26, %c0_27] : memref<16x24xf32, #tpu.memory_space<vmem>>, vector<16x24xf32>
    %c0_28 = arith.constant 0 : index
    %c0_29 = arith.constant 0 : index
    %20 = vector.load %arg9[%c0_28, %c0_29] : memref<24x20xf32, #tpu.memory_space<vmem>>, vector<24x20xf32>
    %cst = arith.constant dense<0.000000e+00> : vector<16x20xf32>
    %21 = tpu.matmul %19, %20, %cst {dimension_numbers = #tpu.dot_dimension_numbers<[1], [0], [0], [1], [0, 0, 1, 1], [], []>} : vector<16x24xf32>, vector<24x20xf32>, vector<16x20xf32> -> vector<16x20xf32>
    %c0_30 = arith.constant 0 : index
    %c0_31 = arith.constant 0 : index
    %22 = vector.load %arg5[%c0_30, %c0_31] : memref<16x1xf32, #tpu.memory_space<vmem>>, vector<16x1xf32>
    %23 = vector.broadcast %22 : vector<16x1xf32> to vector<16x20xf32>
    %24 = arith.addf %21, %23 : vector<16x20xf32>
    %25 = vector.extract_strided_slice %24 {offsets = [0, 0], sizes = [8, 20], strides = [1, 1]} : vector<16x20xf32> to vector<8x20xf32>
    %cst_32 = arith.constant 0.000000e+00 : f32
    %26 = vector.broadcast %cst_32 : f32 to vector<8x20xf32>
    %27 = arith.maximumf %25, %26 : vector<8x20xf32>
    %c0_33 = arith.constant 0 : index
    %c0_34 = arith.constant 0 : index
    %28 = vector.load %arg10[%c0_33, %c0_34] : memref<16x20xf32, #tpu.memory_space<vmem>>, vector<8x20xf32>
    tpu.vector_store %arg10[%c0_33, %c0_34], %27 {strides = array<i32>} : memref<16x20xf32, #tpu.memory_space<vmem>>, vector<8x20xf32>,
    %29 = vector.extract_strided_slice %24 {offsets = [8, 0], sizes = [8, 16], strides = [1, 1]} : vector<16x20xf32> to vector<8x16xf32>
    %c8_35 = arith.constant 8 : index
    %c0_36 = arith.constant 0 : index
    %30 = vector.load %arg10[%c8_35, %c0_36] : memref<16x20xf32, #tpu.memory_space<vmem>>, vector<8x16xf32>
    tpu.vector_store %arg10[%c8_35, %c0_36], %29 {strides = array<i32>} : memref<16x20xf32, #tpu.memory_space<vmem>>, vector<8x16xf32>,
    %31 = arith.extui %0 : i1 to i32
    %c0_i32_37 = arith.constant 0 : i32
    %32 = arith.cmpi ne, %31, %c0_i32_37 : i32
    scf.if %32 {
      %cst_137 = arith.constant 0.000000e+00 : f32
      %117 = vector.broadcast %cst_137 : f32 to vector<8x4xf32>
      %c0_138 = arith.constant 0 : index
      %c16_139 = arith.constant 16 : index
      %118 = vector.load %arg10[%c0_138, %c16_139] : memref<16x20xf32, #tpu.memory_space<vmem>>, vector<8x4xf32>
      tpu.vector_store %arg10[%c0_138, %c16_139], %117 {strides = array<i32>} : memref<16x20xf32, #tpu.memory_space<vmem>>, vector<8x4xf32>,
    } else {
    }
    %c0_38 = arith.constant 0 : index
    %c0_39 = arith.constant 0 : index
    %c0_40 = arith.constant 0 : index
    %33 = vector.load %arg6[%c0_38, %c0_39, %c0_40] : memref<3x8x8xf32, #tpu.memory_space<vmem>>, vector<1x8x8xf32>
    %34 = vector.shape_cast %33 : vector<1x8x8xf32> to vector<8x8xf32>
    %c0_41 = arith.constant 0 : index
    %c0_42 = arith.constant 0 : index
    %35 = vector.load %arg10[%c0_41, %c0_42] : memref<16x20xf32, #tpu.memory_space<vmem>>, vector<8x16xf32>
    %cst_43 = arith.constant dense<0.000000e+00> : vector<8x16xf32>
    %36 = tpu.matmul %34, %35, %cst_43 {dimension_numbers = #tpu.dot_dimension_numbers<[1], [0], [0], [1], [0, 0, 1, 1], [], []>} : vector<8x8xf32>, vector<8x16xf32>, vector<8x16xf32> -> vector<8x16xf32>
    %c1 = arith.constant 1 : index
    %c0_44 = arith.constant 0 : index
    %c0_45 = arith.constant 0 : index
    %37 = vector.load %arg6[%c1, %c0_44, %c0_45] : memref<3x8x8xf32, #tpu.memory_space<vmem>>, vector<1x8x8xf32>
    %38 = vector.shape_cast %37 : vector<1x8x8xf32> to vector<8x8xf32>
    %c0_46 = arith.constant 0 : index
    %c2_47 = arith.constant 2 : index
    %39 = vector.load %arg10[%c0_46, %c2_47] : memref<16x20xf32, #tpu.memory_space<vmem>>, vector<8x16xf32>
    %cst_48 = arith.constant dense<0.000000e+00> : vector<8x16xf32>
    %40 = tpu.matmul %38, %39, %cst_48 {dimension_numbers = #tpu.dot_dimension_numbers<[1], [0], [0], [1], [0, 0, 1, 1], [], []>} : vector<8x8xf32>, vector<8x16xf32>, vector<8x16xf32> -> vector<8x16xf32>
    %41 = arith.addf %36, %40 : vector<8x16xf32>
    %c2_49 = arith.constant 2 : index
    %c0_50 = arith.constant 0 : index
    %c0_51 = arith.constant 0 : index
    %42 = vector.load %arg6[%c2_49, %c0_50, %c0_51] : memref<3x8x8xf32, #tpu.memory_space<vmem>>, vector<1x8x8xf32>
    %43 = vector.shape_cast %42 : vector<1x8x8xf32> to vector<8x8xf32>
    %c0_52 = arith.constant 0 : index
    %c4_53 = arith.constant 4 : index
    %44 = vector.load %arg10[%c0_52, %c4_53] : memref<16x20xf32, #tpu.memory_space<vmem>>, vector<8x16xf32>
    %cst_54 = arith.constant dense<0.000000e+00> : vector<8x16xf32>
    %45 = tpu.matmul %43, %44, %cst_54 {dimension_numbers = #tpu.dot_dimension_numbers<[1], [0], [0], [1], [0, 0, 1, 1], [], []>} : vector<8x8xf32>, vector<8x16xf32>, vector<8x16xf32> -> vector<8x16xf32>
    %46 = arith.addf %41, %45 : vector<8x16xf32>
    %c0_55 = arith.constant 0 : index
    %c0_56 = arith.constant 0 : index
    %47 = vector.load %arg7[%c0_55, %c0_56] : memref<8x1xf32, #tpu.memory_space<vmem>>, vector<8x1xf32>
    %48 = vector.broadcast %47 : vector<8x1xf32> to vector<8x16xf32>
    %49 = arith.addf %46, %48 : vector<8x16xf32>
    %cst_57 = arith.constant 0.000000e+00 : f32
    %50 = vector.broadcast %cst_57 : f32 to vector<8x16xf32>
    %51 = arith.maximumf %49, %50 : vector<8x16xf32>
    %c8_58 = arith.constant 8 : index
    %c0_59 = arith.constant 0 : index
    %52 = vector.load %arg10[%c8_58, %c0_59] : memref<16x20xf32, #tpu.memory_space<vmem>>, vector<8x16xf32>
    %53 = arith.addf %51, %52 : vector<8x16xf32>
    %cst_60 = arith.constant 0.000000e+00 : f32
    %54 = vector.broadcast %cst_60 : f32 to vector<8x16xf32>
    %55 = arith.maximumf %53, %54 : vector<8x16xf32>
    %c0_61 = arith.constant 0 : index
    %c0_62 = arith.constant 0 : index
    %c0_63 = arith.constant 0 : index
    %56 = vector.load %arg8[%c0_61, %c0_62, %c0_63] : memref<2x8x16xf32, #tpu.memory_space<vmem>>, vector<1x8x16xf32>
    %57 = vector.shape_cast %56 : vector<1x8x16xf32> to vector<8x16xf32>
    %58 = vector.shape_cast %55 : vector<8x16xf32> to vector<1x8x16xf32>
    tpu.vector_store %arg8[%c0_61, %c0_62, %c0_63], %58 {strides = array<i32>} : memref<2x8x16xf32, #tpu.memory_space<vmem>>, vector<1x8x16xf32>,
    %c1_64 = arith.constant 1 : index
    %c0_65 = arith.constant 0 : index
    %c0_66 = arith.constant 0 : index
    %59 = vector.load %arg2[%c1_64, %c0_65, %c0_66] : memref<2x8x16xf32, #tpu.memory_space<vmem>>, vector<1x8x16xf32>
    %60 = vector.shape_cast %59 : vector<1x8x16xf32> to vector<8x16xf32>
    %c0_67 = arith.constant 0 : index
    %c0_68 = arith.constant 0 : index
    %61 = vector.load %arg9[%c0_67, %c0_68] : memref<24x20xf32, #tpu.memory_space<vmem>>, vector<8x16xf32>
    tpu.vector_store %arg9[%c0_67, %c0_68], %60 {strides = array<i32>} : memref<24x20xf32, #tpu.memory_space<vmem>>, vector<8x16xf32>,
    %c1_69 = arith.constant 1 : index
    %c0_70 = arith.constant 0 : index
    %c0_71 = arith.constant 0 : index
    %c0_72 = arith.constant 0 : index
    %62 = vector.load %arg3[%c1_69, %c0_70, %c0_71, %c0_72] : memref<2x1x8x8xf32, #tpu.memory_space<vmem>>, vector<1x1x8x4xf32>
    %63 = vector.shape_cast %62 : vector<1x1x8x4xf32> to vector<8x4xf32>
    %c0_73 = arith.constant 0 : index
    %c16_74 = arith.constant 16 : index
    %64 = vector.load %arg9[%c0_73, %c16_74] : memref<24x20xf32, #tpu.memory_space<vmem>>, vector<8x4xf32>
    tpu.vector_store %arg9[%c0_73, %c16_74], %63 {strides = array<i32>} : memref<24x20xf32, #tpu.memory_space<vmem>>, vector<8x4xf32>,
    %c1_75 = arith.constant 1 : index
    %c0_76 = arith.constant 0 : index
    %c2_77 = arith.constant 2 : index
    %65 = vector.load %arg2[%c1_75, %c0_76, %c2_77] : memref<2x8x16xf32, #tpu.memory_space<vmem>>, vector<1x8x14xf32>
    %66 = vector.shape_cast %65 : vector<1x8x14xf32> to vector<8x14xf32>
    %c8_78 = arith.constant 8 : index
    %c0_79 = arith.constant 0 : index
    %67 = vector.load %arg9[%c8_78, %c0_79] : memref<24x20xf32, #tpu.memory_space<vmem>>, vector<8x14xf32>
    tpu.vector_store %arg9[%c8_78, %c0_79], %66 {strides = array<i32>} : memref<24x20xf32, #tpu.memory_space<vmem>>, vector<8x14xf32>,
    %c1_80 = arith.constant 1 : index
    %c0_81 = arith.constant 0 : index
    %c0_82 = arith.constant 0 : index
    %c0_83 = arith.constant 0 : index
    %68 = vector.load %arg3[%c1_80, %c0_81, %c0_82, %c0_83] : memref<2x1x8x8xf32, #tpu.memory_space<vmem>>, vector<1x1x8x6xf32>
    %69 = vector.shape_cast %68 : vector<1x1x8x6xf32> to vector<8x6xf32>
    %c8_84 = arith.constant 8 : index
    %c14_85 = arith.constant 14 : index
    %70 = vector.load %arg9[%c8_84, %c14_85] : memref<24x20xf32, #tpu.memory_space<vmem>>, vector<8x6xf32>
    tpu.vector_store %arg9[%c8_84, %c14_85], %69 {strides = array<i32>} : memref<24x20xf32, #tpu.memory_space<vmem>>, vector<8x6xf32>,
    %c1_86 = arith.constant 1 : index
    %c0_87 = arith.constant 0 : index
    %c4_88 = arith.constant 4 : index
    %71 = vector.load %arg2[%c1_86, %c0_87, %c4_88] : memref<2x8x16xf32, #tpu.memory_space<vmem>>, vector<1x8x12xf32>
    %72 = vector.shape_cast %71 : vector<1x8x12xf32> to vector<8x12xf32>
    %c16_89 = arith.constant 16 : index
    %c0_90 = arith.constant 0 : index
    %73 = vector.load %arg9[%c16_89, %c0_90] : memref<24x20xf32, #tpu.memory_space<vmem>>, vector<8x12xf32>
    tpu.vector_store %arg9[%c16_89, %c0_90], %72 {strides = array<i32>} : memref<24x20xf32, #tpu.memory_space<vmem>>, vector<8x12xf32>,
    %c1_91 = arith.constant 1 : index
    %c0_92 = arith.constant 0 : index
    %c0_93 = arith.constant 0 : index
    %c0_94 = arith.constant 0 : index
    %74 = vector.load %arg3[%c1_91, %c0_92, %c0_93, %c0_94] : memref<2x1x8x8xf32, #tpu.memory_space<vmem>>, vector<1x1x8x8xf32>
    %75 = vector.shape_cast %74 : vector<1x1x8x8xf32> to vector<8x8xf32>
    %c16_95 = arith.constant 16 : index
    %c12_96 = arith.constant 12 : index
    %76 = vector.load %arg9[%c16_95, %c12_96] : memref<24x20xf32, #tpu.memory_space<vmem>>, vector<8x8xf32>
    tpu.vector_store %arg9[%c16_95, %c12_96], %75 {strides = array<i32>} : memref<24x20xf32, #tpu.memory_space<vmem>>, vector<8x8xf32>,
    %c0_97 = arith.constant 0 : index
    %c0_98 = arith.constant 0 : index
    %77 = vector.load %arg4[%c0_97, %c0_98] : memref<16x24xf32, #tpu.memory_space<vmem>>, vector<16x24xf32>
    %c0_99 = arith.constant 0 : index
    %c0_100 = arith.constant 0 : index
    %78 = vector.load %arg9[%c0_99, %c0_100] : memref<24x20xf32, #tpu.memory_space<vmem>>, vector<24x20xf32>
    %cst_101 = arith.constant dense<0.000000e+00> : vector<16x20xf32>
    %79 = tpu.matmul %77, %78, %cst_101 {dimension_numbers = #tpu.dot_dimension_numbers<[1], [0], [0], [1], [0, 0, 1, 1], [], []>} : vector<16x24xf32>, vector<24x20xf32>, vector<16x20xf32> -> vector<16x20xf32>
    %c0_102 = arith.constant 0 : index
    %c0_103 = arith.constant 0 : index
    %80 = vector.load %arg5[%c0_102, %c0_103] : memref<16x1xf32, #tpu.memory_space<vmem>>, vector<16x1xf32>
    %81 = vector.broadcast %80 : vector<16x1xf32> to vector<16x20xf32>
    %82 = arith.addf %79, %81 : vector<16x20xf32>
    %83 = vector.extract_strided_slice %82 {offsets = [0, 0], sizes = [8, 20], strides = [1, 1]} : vector<16x20xf32> to vector<8x20xf32>
    %cst_104 = arith.constant 0.000000e+00 : f32
    %84 = vector.broadcast %cst_104 : f32 to vector<8x20xf32>
    %85 = arith.maximumf %83, %84 : vector<8x20xf32>
    %c0_105 = arith.constant 0 : index
    %c0_106 = arith.constant 0 : index
    %86 = vector.load %arg10[%c0_105, %c0_106] : memref<16x20xf32, #tpu.memory_space<vmem>>, vector<8x20xf32>
    tpu.vector_store %arg10[%c0_105, %c0_106], %85 {strides = array<i32>} : memref<16x20xf32, #tpu.memory_space<vmem>>, vector<8x20xf32>,
    %87 = vector.extract_strided_slice %82 {offsets = [8, 0], sizes = [8, 16], strides = [1, 1]} : vector<16x20xf32> to vector<8x16xf32>
    %c8_107 = arith.constant 8 : index
    %c0_108 = arith.constant 0 : index
    %88 = vector.load %arg10[%c8_107, %c0_108] : memref<16x20xf32, #tpu.memory_space<vmem>>, vector<8x16xf32>
    tpu.vector_store %arg10[%c8_107, %c0_108], %87 {strides = array<i32>} : memref<16x20xf32, #tpu.memory_space<vmem>>, vector<8x16xf32>,
    %89 = arith.extui %0 : i1 to i32
    %c0_i32_109 = arith.constant 0 : i32
    %90 = arith.cmpi ne, %89, %c0_i32_109 : i32
    scf.if %90 {
      %cst_137 = arith.constant 0.000000e+00 : f32
      %117 = vector.broadcast %cst_137 : f32 to vector<8x4xf32>
      %c0_138 = arith.constant 0 : index
      %c16_139 = arith.constant 16 : index
      %118 = vector.load %arg10[%c0_138, %c16_139] : memref<16x20xf32, #tpu.memory_space<vmem>>, vector<8x4xf32>
      tpu.vector_store %arg10[%c0_138, %c16_139], %117 {strides = array<i32>} : memref<16x20xf32, #tpu.memory_space<vmem>>, vector<8x4xf32>,
    } else {
    }
    %c0_110 = arith.constant 0 : index
    %c0_111 = arith.constant 0 : index
    %c0_112 = arith.constant 0 : index
    %91 = vector.load %arg6[%c0_110, %c0_111, %c0_112] : memref<3x8x8xf32, #tpu.memory_space<vmem>>, vector<1x8x8xf32>
    %92 = vector.shape_cast %91 : vector<1x8x8xf32> to vector<8x8xf32>
    %c0_113 = arith.constant 0 : index
    %c0_114 = arith.constant 0 : index
    %93 = vector.load %arg10[%c0_113, %c0_114] : memref<16x20xf32, #tpu.memory_space<vmem>>, vector<8x16xf32>
    %cst_115 = arith.constant dense<0.000000e+00> : vector<8x16xf32>
    %94 = tpu.matmul %92, %93, %cst_115 {dimension_numbers = #tpu.dot_dimension_numbers<[1], [0], [0], [1], [0, 0, 1, 1], [], []>} : vector<8x8xf32>, vector<8x16xf32>, vector<8x16xf32> -> vector<8x16xf32>
    %c1_116 = arith.constant 1 : index
    %c0_117 = arith.constant 0 : index
    %c0_118 = arith.constant 0 : index
    %95 = vector.load %arg6[%c1_116, %c0_117, %c0_118] : memref<3x8x8xf32, #tpu.memory_space<vmem>>, vector<1x8x8xf32>
    %96 = vector.shape_cast %95 : vector<1x8x8xf32> to vector<8x8xf32>
    %c0_119 = arith.constant 0 : index
    %c2_120 = arith.constant 2 : index
    %97 = vector.load %arg10[%c0_119, %c2_120] : memref<16x20xf32, #tpu.memory_space<vmem>>, vector<8x16xf32>
    %cst_121 = arith.constant dense<0.000000e+00> : vector<8x16xf32>
    %98 = tpu.matmul %96, %97, %cst_121 {dimension_numbers = #tpu.dot_dimension_numbers<[1], [0], [0], [1], [0, 0, 1, 1], [], []>} : vector<8x8xf32>, vector<8x16xf32>, vector<8x16xf32> -> vector<8x16xf32>
    %99 = arith.addf %94, %98 : vector<8x16xf32>
    %c2_122 = arith.constant 2 : index
    %c0_123 = arith.constant 0 : index
    %c0_124 = arith.constant 0 : index
    %100 = vector.load %arg6[%c2_122, %c0_123, %c0_124] : memref<3x8x8xf32, #tpu.memory_space<vmem>>, vector<1x8x8xf32>
    %101 = vector.shape_cast %100 : vector<1x8x8xf32> to vector<8x8xf32>
    %c0_125 = arith.constant 0 : index
    %c4_126 = arith.constant 4 : index
    %102 = vector.load %arg10[%c0_125, %c4_126] : memref<16x20xf32, #tpu.memory_space<vmem>>, vector<8x16xf32>
    %cst_127 = arith.constant dense<0.000000e+00> : vector<8x16xf32>
    %103 = tpu.matmul %101, %102, %cst_127 {dimension_numbers = #tpu.dot_dimension_numbers<[1], [0], [0], [1], [0, 0, 1, 1], [], []>} : vector<8x8xf32>, vector<8x16xf32>, vector<8x16xf32> -> vector<8x16xf32>
    %104 = arith.addf %99, %103 : vector<8x16xf32>
    %c0_128 = arith.constant 0 : index
    %c0_129 = arith.constant 0 : index
    %105 = vector.load %arg7[%c0_128, %c0_129] : memref<8x1xf32, #tpu.memory_space<vmem>>, vector<8x1xf32>
    %106 = vector.broadcast %105 : vector<8x1xf32> to vector<8x16xf32>
    %107 = arith.addf %104, %106 : vector<8x16xf32>
    %cst_130 = arith.constant 0.000000e+00 : f32
    %108 = vector.broadcast %cst_130 : f32 to vector<8x16xf32>
    %109 = arith.maximumf %107, %108 : vector<8x16xf32>
    %c8_131 = arith.constant 8 : index
    %c0_132 = arith.constant 0 : index
    %110 = vector.load %arg10[%c8_131, %c0_132] : memref<16x20xf32, #tpu.memory_space<vmem>>, vector<8x16xf32>
    %111 = arith.addf %109, %110 : vector<8x16xf32>
    %cst_133 = arith.constant 0.000000e+00 : f32
    %112 = vector.broadcast %cst_133 : f32 to vector<8x16xf32>
    %113 = arith.maximumf %111, %112 : vector<8x16xf32>
    %c1_134 = arith.constant 1 : index
    %c0_135 = arith.constant 0 : index
    %c0_136 = arith.constant 0 : index
    %114 = vector.load %arg8[%c1_134, %c0_135, %c0_136] : memref<2x8x16xf32, #tpu.memory_space<vmem>>, vector<1x8x16xf32>
    %115 = vector.shape_cast %114 : vector<1x8x16xf32> to vector<8x16xf32>
    %116 = vector.shape_cast %113 : vector<8x16xf32> to vector<1x8x16xf32>
    tpu.vector_store %arg8[%c1_134, %c0_135, %c0_136], %116 {strides = array<i32>} : memref<2x8x16xf32, #tpu.memory_space<vmem>>, vector<1x8x16xf32>,
    return
  }
  func.func @transform_0(%arg0: i32, %arg1: i32) -> (i32, i32, i32) {
    %c0_i32 = arith.constant 0 : i32
    %c0_i32_0 = arith.constant 0 : i32
    return %arg0, %c0_i32, %arg1 : i32, i32, i32
  }
  func.func @transform_1(%arg0: i32, %arg1: i32) -> (i32, i32, i32, i32) {
    %c0_i32 = arith.constant 0 : i32
    %c0_i32_0 = arith.constant 0 : i32
    %c0_i32_1 = arith.constant 0 : i32
    return %arg0, %arg1, %c0_i32, %c0_i32_0 : i32, i32, i32, i32
  }
  func.func @transform_2(%arg0: i32, %arg1: i32) -> (i32, i32) {
    %c0_i32 = arith.constant 0 : i32
    %c0_i32_0 = arith.constant 0 : i32
    %c0_i32_1 = arith.constant 0 : i32
    return %c0_i32, %c0_i32_0 : i32, i32
  }
  func.func @transform_3(%arg0: i32, %arg1: i32) -> (i32, i32) {
    %c0_i32 = arith.constant 0 : i32
    %c0_i32_0 = arith.constant 0 : i32
    %c0_i32_1 = arith.constant 0 : i32
    return %c0_i32, %c0_i32_0 : i32, i32
  }
  func.func @transform_4(%arg0: i32, %arg1: i32) -> (i32, i32, i32) {
    %c0_i32 = arith.constant 0 : i32
    %c0_i32_0 = arith.constant 0 : i32
    %c0_i32_1 = arith.constant 0 : i32
    %c0_i32_2 = arith.constant 0 : i32
    return %c0_i32, %c0_i32_0, %c0_i32_1 : i32, i32, i32
  }
  func.func @transform_5(%arg0: i32, %arg1: i32) -> (i32, i32) {
    %c0_i32 = arith.constant 0 : i32
    %c0_i32_0 = arith.constant 0 : i32
    %c0_i32_1 = arith.constant 0 : i32
    return %c0_i32, %c0_i32_0 : i32, i32
  }
  func.func @transform_6(%arg0: i32, %arg1: i32) -> (i32, i32, i32) {
    %c0_i32 = arith.constant 0 : i32
    %c0_i32_0 = arith.constant 0 : i32
    return %arg0, %c0_i32, %arg1 : i32, i32, i32
  }
}

</mosaic_0001>

<llo_original>
// kernel: tpu_custom_call.1
$region0: #{tpu_custom_call.1}
  #allocation0 [shape = 'u32[]', space=smem, size = 0x4, offset = 0x4, fixed_abs, tag = 'smem constant byte address 0x4 - core index']
  #allocation1 [shape = 'u32[72,128]{1,0:T(1,128)}', space=vmem, size = 0x9000, scoped, tag = 'internal scratch']
  #allocation2 [shape = 'f32[24,20]{1,0:T(8,128)}', space=vmem, size = 0x3000, scoped, tag = 'scratch operand']
  #allocation3 [shape = 'f32[16,20]{1,0:T(8,128)}', space=vmem, size = 0x2000, scoped, tag = 'scratch operand']
  %s0 = inlined_call_operand.hbm [shape: f32[2,8,16], index: 0, kind: input, shape index: {}]
  %s1 = inlined_call_operand.hbm [shape: f32[2,1,8,8], index: 1, kind: input, shape index: {}]
  %s2 = inlined_call_operand.hbm [shape: f32[16,24], index: 2, kind: input, shape index: {}]
  %s3 = inlined_call_operand.vmem [shape: f32[16,1], index: 3, kind: input, shape index: {}]
  %s4 = inlined_call_operand.vmem [shape: f32[3,8,8], index: 4, kind: input, shape index: {}]
  %s5 = inlined_call_operand.vmem [shape: f32[8,1], index: 5, kind: input, shape index: {}]
  %s6 = inlined_call_operand.hbm [shape: f32[2,8,16], index: 6, kind: output, shape index: {}]
  %s7 = sld [smem:[#allocation0]]
  $region54: #{tpu_custom_call.1} parent=0
    _
  %s9 = ssub.s32 1, %s7
  %s10 = scalar_select 0, %s9, %s7
  $region1: #{tpu_custom_call.1} parent=0
    #allocation4 [shape = 'u8[8192]{0}', space=vmem, size = 0x2000, scoped, tag = 'input window, operand 0, single buffered']
    #allocation5 [shape = 's32[1]{0}', space=sflag, size = 0x4, scoped, tag = 'scoped memory for tpu_custom_call.1']
    #allocation6 [shape = 's32[1]{0}', space=sflag, size = 0x4, scoped, tag = 'scoped memory for tpu_custom_call.1']
    #allocation7 [shape = 'u8[8192]{0}', space=vmem, size = 0x2000, scoped, tag = 'input window, operand 1, single buffered']
    #allocation8 [shape = 's32[1]{0}', space=sflag, size = 0x4, scoped, tag = 'scoped memory for tpu_custom_call.1']
    #allocation9 [shape = 'u8[8192]{0}', space=vmem, size = 0x2000, scoped, tag = 'input window, operand 2, single buffered']
    #allocation10 [shape = 'u8[8192]{0}', space=vmem, size = 0x2000, scoped, tag = 'output window, operand 0, single buffered']
    %11 = vsyncpa [#allocation5], 0
    %12 = vsyncpa [#allocation8], 0
    %13 = vsyncpa [#allocation6], 0
    // Predicated region
    $region2: #{tpu_custom_call.1} parent=1 // pred_check
      _
    $region3: #{tpu_custom_call.1} parent=1 // pred_check_branch
      %15 = sbr.rel (0) target = $region5
    $region4: #{tpu_custom_call.1} parent=1 // pred_region
      %17 = vsyncadd [#allocation5], 0
      %s18 = sshll.u32 %s0, 4
      %s19 = int_to_ptr.hbm [resolvable:$true] %s18
      %s20 = sshll.u32 [#allocation4], 4
      %s21 = int_to_ptr.vmem [resolvable:$true] %s20
      %26 = dma.hbm_to_vmem [thread:$0]  %s19, 256, %s21, [#allocation5], 128, 128, 8
    $region5: #{tpu_custom_call.1} parent=1 // pred_fallthru
      _
    // Predicated region
    $region6: #{tpu_custom_call.1} parent=1 // pred_check
      _
    $region7: #{tpu_custom_call.1} parent=1 // pred_check_branch
      %28 = sbr.rel (0) target = $region9
    $region8: #{tpu_custom_call.1} parent=1 // pred_region
      %30 = vsyncadd [#allocation8], 0
      %s31 = sshll.u32 %s1, 4
      %s32 = int_to_ptr.hbm [resolvable:$true] %s31
      %s33 = sshll.u32 [#allocation7], 4
      %s34 = int_to_ptr.vmem [resolvable:$true] %s33
      %39 = dma.hbm_to_vmem [thread:$0]  %s32, 256, %s34, [#allocation8], 128, 128, 8
    $region9: #{tpu_custom_call.1} parent=1 // pred_fallthru
      _
    // Predicated region
    $region10: #{tpu_custom_call.1} parent=1 // pred_check
      _
    $region11: #{tpu_custom_call.1} parent=1 // pred_check_branch
      %41 = sbr.rel (0) target = $region13
    $region12: #{tpu_custom_call.1} parent=1 // pred_region
      %43 = vsyncadd [#allocation8], 0
      %s44 = sshll.u32 %s2, 4
      %s45 = int_to_ptr.hbm [resolvable:$true] %s44
      %s46 = sshll.u32 [#allocation9], 4
      %s47 = int_to_ptr.vmem [resolvable:$true] %s46
      %52 = dma.hbm_to_vmem [thread:$0]  %s45, 256, %s47, [#allocation8], 128, 128, 8
    $region13: #{tpu_custom_call.1} parent=1 // pred_fallthru
      _
    // Predicated region
    $region14: #{tpu_custom_call.1} parent=1 // pred_check
      _
    $region15: #{tpu_custom_call.1} parent=1 // pred_check_branch
      %54 = sbr.rel (0) target = $region17
    $region16: #{tpu_custom_call.1} parent=1 // pred_region
      _
    $region17: #{tpu_custom_call.1} parent=1 // pred_fallthru
      _
    // Predicated region
    $region18: #{tpu_custom_call.1} parent=1 // pred_check
      _
    $region19: #{tpu_custom_call.1} parent=1 // pred_check_branch
      %56 = sbr.rel (0) target = $region21
    $region20: #{tpu_custom_call.1} parent=1 // pred_region
      _
    $region21: #{tpu_custom_call.1} parent=1 // pred_fallthru
      _
    // Predicated region
    $region22: #{tpu_custom_call.1} parent=1 // pred_check
      _
    $region23: #{tpu_custom_call.1} parent=1 // pred_check_branch
      %58 = sbr.rel (0) target = $region25
    $region24: #{tpu_custom_call.1} parent=1 // pred_region
      _
    $region25: #{tpu_custom_call.1} parent=1 // pred_fallthru
      _
    // Predicated region
    $region26: #{tpu_custom_call.1} parent=1 // pred_check
      _
    $region27: #{tpu_custom_call.1} parent=1 // pred_check_branch
      %60 = sbr.rel (0) target = $region29
    $region28: #{tpu_custom_call.1} parent=1 // pred_region
      %62 = dma.done [#allocation5], 256
    $region29: #{tpu_custom_call.1} parent=1 // pred_fallthru
      _
    // Predicated region
    $region30: #{tpu_custom_call.1} parent=1 // pred_check
      _
    $region31: #{tpu_custom_call.1} parent=1 // pred_check_branch
      %64 = sbr.rel (0) target = $region33
    $region32: #{tpu_custom_call.1} parent=1 // pred_region
      %66 = dma.done [#allocation8], 256
    $region33: #{tpu_custom_call.1} parent=1 // pred_fallthru
      _
    // Predicated region
    $region34: #{tpu_custom_call.1} parent=1 // pred_check
      _
    $region35: #{tpu_custom_call.1} parent=1 // pred_check_branch
      %68 = sbr.rel (0) target = $region37
    $region36: #{tpu_custom_call.1} parent=1 // pred_region
      %70 = dma.done [#allocation8], 256
    $region37: #{tpu_custom_call.1} parent=1 // pred_fallthru
      _
    %p71 = scmp.eq.s32.totalorder 0, 0
    %v72 = vld [vmem:[#allocation4] sm:$0xff]
    %vm73 = vcmask 130048
    %74 = vst.msk [vmem:[#allocation2] sm:$0xff] %vm73, %v72
    %v75 = vld [vmem:[#allocation7] sm:$0xff]
    %77 = vrot.lane.b32.xlu0 %v75, 16
    %v78 = vpop.permute.xlu0 %77
    %vm80 = vcmask 162944
    %81 = vst.msk [vmem:[#allocation2] sm:$0xff] %vm80, %v78
    %v82 = vld [vmem:[#allocation4] sm:$0xff]
    %84 = vrot.lane.b32.xlu0 %v82, 126
    %v85 = vpop.permute.xlu0 %84
    %vm87 = vcmask 113664
    %88 = vst.msk [vmem:[#allocation2 + $0x8] sm:$0xff] %vm87, %v85
    %v89 = vld [vmem:[#allocation7] sm:$0xff]
    %91 = vrot.lane.b32.xlu0 %v89, 14
    %v92 = vpop.permute.xlu0 %91
    %vm94 = vcmask 162928
    %95 = vst.msk [vmem:[#allocation2 + $0x8] sm:$0xff] %vm94, %v92
    %v96 = vld [vmem:[#allocation4] sm:$0xff]
    %98 = vrot.lane.b32.xlu0 %v96, 124
    %v99 = vpop.permute.xlu0 %98
    %vm101 = vcmask 97280
    %102 = vst.msk [vmem:[#allocation2 + $0x10] sm:$0xff] %vm101, %v99
    %v103 = vld [vmem:[#allocation7] sm:$0xff]
    %105 = vrot.lane.b32.xlu0 %v103, 12
    %v106 = vpop.permute.xlu0 %105
    %vm108 = vcmask 162912
    %109 = vst.msk [vmem:[#allocation2 + $0x10] sm:$0xff] %vm108, %v106
    %v110 = vld [vmem:[#allocation9] sm:$0xff]
    %v111 = vld [vmem:[#allocation9 + $0x8] sm:$0xff]
    %v112 = vld [vmem:[#allocation2] sm:$0xff]
    %v113 = vld [vmem:[#allocation2 + $0x8] sm:$0xff]
    %v114 = vld [vmem:[#allocation2 + $0x10] sm:$0xff]
    %v115 = vld [vmem:[%s3] sm:$0xff]
    %v116 = vld [vmem:[%s3 + $0x8] sm:$0xff]
    %118 = vset.pattern.permute.xlu0 0
    %119 = vperm.xlu0 %118, %v115
    %v120 = vpop.permute.xlu0 %119
    %123 = vset.pattern.permute.xlu0 0
    %124 = vperm.xlu0 %123, %v116
    %v125 = vpop.permute.xlu0 %124
    %vm127 = vcmask 195584
    %v129 = vsel %vm127, %v110, 0
    %v132 = vsel %vm127, %v111, 0
    %134 = vmatpush.msra.mxu0 0.0
    %135 = vmatpush.msra.mxu0 0.0
    %136 = vmatpush.msra.mxu0 0.0
    %137 = vmatpush.msra.mxu0 0.0
    %138 = vmatpush.msra.mxu0 0.0
    %139 = vmatpush.msra.mxu0 0.0
    %140 = vmatpush.msra.mxu0 0.0
    %141 = vmatpush.msra.mxu0 0.0
    %142 = vmatpush.msra.mxu0 0.0
    %143 = vmatpush.msra.mxu0 0.0
    %144 = vmatpush.msra.mxu0 0.0
    %145 = vmatpush.msra.mxu0 0.0
    %146 = vmatpush.msra.mxu0 0.0
    %147 = vmatpush.msra.mxu0 %v114
    %148 = vmatpush.msra.mxu0 %v113
    %149 = vmatpush.msra.mxu0 %v112
    %150 = vmatmul.f32.gmra.mxu0 %v129
    %v151 = vpop.f32.mrf.mxu0
    %v152 = vadd.f32 %v120, %v151
    %153 = vmatmul.f32.gmra.mxu0 %v132
    %v154 = vpop.f32.mrf.mxu0
    %v155 = vadd.f32 %v125, %v154
    %156 = vdwg.mxu0
    %v157 = vmax.f32 %v152, 0.0
    %vm158 = vcmask 162816
    %159 = vst.msk [vmem:[#allocation3] sm:$0xff] %vm158, %v157
    %160 = vst.msk [vmem:[#allocation3 + $0x8] sm:$0xff] %vm73, %v155
    // Predicated region
    $region38: #{tpu_custom_call.1} parent=1 // pred_check
      %p161 = pneg %p71
    $region39: #{tpu_custom_call.1} parent=1 // pred_check_branch
      %163 = sbr.rel (%p161) target = $region41
    $region40: #{tpu_custom_call.1} parent=1 // pred_region
      %164 = vst.msk [vmem:[#allocation3] sm:$0xff] %vm80, 0.0
    $region41: #{tpu_custom_call.1} parent=1 // pred_fallthru
      _
    %v165 = vld [vmem:[%s4] sm:$0xff]
    %v166 = vld [vmem:[#allocation3] sm:$0xff]
    %s167 = scalar_lea.vmem %s4, 8
    %v168 = vld [vmem:[%s167] sm:$0xff]
    %170 = vrot.lane.b32.xlu0 %v166, 126
    %v171 = vpop.permute.xlu0 %170
    %vm173 = vcmask 64512
    %v175 = vsel %vm173, %v168, 0
    %177 = vmatpush.msra.mxu0 0.0
    %178 = vmatpush.msra.mxu0 0.0
    %179 = vmatpush.msra.mxu0 0.0
    %180 = vmatpush.msra.mxu0 0.0
    %181 = vmatpush.msra.mxu0 0.0
    %182 = vmatpush.msra.mxu0 0.0
    %183 = vmatpush.msra.mxu0 0.0
    %184 = vmatpush.msra.mxu0 0.0
    %185 = vmatpush.msra.mxu0 0.0
    %186 = vmatpush.msra.mxu0 0.0
    %187 = vmatpush.msra.mxu0 0.0
    %188 = vmatpush.msra.mxu0 0.0
    %189 = vmatpush.msra.mxu0 0.0
    %190 = vmatpush.msra.mxu0 0.0
    %191 = vmatpush.msra.mxu0 0.0
    %192 = vmatpush.msra.mxu0 %v171
    %193 = vmatmul.f32.gmra.mxu0 %v175
    %v194 = vpop.f32.mrf.mxu0
    %v195 = vadd.f32 0.0, %v194
    %196 = vdwg.mxu0
    %v198 = vsel %vm173, %v165, 0
    %200 = vmatpush.msra.mxu0 0.0
    %201 = vmatpush.msra.mxu0 0.0
    %202 = vmatpush.msra.mxu0 0.0
    %203 = vmatpush.msra.mxu0 0.0
    %204 = vmatpush.msra.mxu0 0.0
    %205 = vmatpush.msra.mxu0 0.0
    %206 = vmatpush.msra.mxu0 0.0
    %207 = vmatpush.msra.mxu0 0.0
    %208 = vmatpush.msra.mxu0 0.0
    %209 = vmatpush.msra.mxu0 0.0
    %210 = vmatpush.msra.mxu0 0.0
    %211 = vmatpush.msra.mxu0 0.0
    %212 = vmatpush.msra.mxu0 0.0
    %213 = vmatpush.msra.mxu0 0.0
    %214 = vmatpush.msra.mxu0 0.0
    %215 = vmatpush.msra.mxu0 %v166
    %216 = vmatmul.f32.gmra.mxu0 %v198
    %v217 = vpop.f32.mrf.mxu0
    %v218 = vadd.f32 %v195, %v217
    %219 = vdwg.mxu0
    %s220 = scalar_lea.vmem %s4, 16
    %v221 = vld [vmem:[%s220] sm:$0xff]
    %222 = vrot.lane.b32.xlu0 %v166, 124
    %v223 = vpop.permute.xlu0 %222
    %v226 = vsel %vm173, %v221, 0
    %228 = vmatpush.msra.mxu0 0.0
    %229 = vmatpush.msra.mxu0 0.0
    %230 = vmatpush.msra.mxu0 0.0
    %231 = vmatpush.msra.mxu0 0.0
    %232 = vmatpush.msra.mxu0 0.0
    %233 = vmatpush.msra.mxu0 0.0
    %234 = vmatpush.msra.mxu0 0.0
    %235 = vmatpush.msra.mxu0 0.0
    %236 = vmatpush.msra.mxu0 0.0
    %237 = vmatpush.msra.mxu0 0.0
    %238 = vmatpush.msra.mxu0 0.0
    %239 = vmatpush.msra.mxu0 0.0
    %240 = vmatpush.msra.mxu0 0.0
    %241 = vmatpush.msra.mxu0 0.0
    %242 = vmatpush.msra.mxu0 0.0
    %243 = vmatpush.msra.mxu0 %v223
    %244 = vmatmul.f32.gmra.mxu0 %v226
    %v245 = vpop.f32.mrf.mxu0
    %v246 = vadd.f32 0.0, %v245
    %247 = vdwg.mxu0
    %v248 = vadd.f32 %v218, %v246
    %v249 = vld [vmem:[%s5] sm:$0xff]
    %251 = vset.pattern.permute.xlu0 0
    %252 = vperm.xlu0 %251, %v249
    %v253 = vpop.permute.xlu0 %252
    %v255 = vadd.f32 %v248, %v253
    %v256 = vmax.f32 %v255, 0.0
    %v257 = vld [vmem:[#allocation3 + $0x8] sm:$0xff]
    %v258 = vadd.f32 %v256, %v257
    %v259 = vmax.f32 %v258, 0.0
    %260 = vst.msk [vmem:[#allocation10] sm:$0xff] %vm73, %v259
    %s261 = scalar_lea.vmem [#allocation4], 8
    %v262 = vld [vmem:[%s261] sm:$0xff]
    %263 = vst.msk [vmem:[#allocation2] sm:$0xff] %vm73, %v262
    %s264 = scalar_lea.vmem [#allocation7], 8
    %v265 = vld [vmem:[%s264] sm:$0xff]
    %267 = vrot.lane.b32.xlu0 %v265, 16
    %v268 = vpop.permute.xlu0 %267
    %270 = vst.msk [vmem:[#allocation2] sm:$0xff] %vm80, %v268
    %v271 = vld [vmem:[%s261] sm:$0xff]
    %273 = vrot.lane.b32.xlu0 %v271, 126
    %v274 = vpop.permute.xlu0 %273
    %276 = vst.msk [vmem:[#allocation2 + $0x8] sm:$0xff] %vm87, %v274
    %v277 = vld [vmem:[%s264] sm:$0xff]
    %279 = vrot.lane.b32.xlu0 %v277, 14
    %v280 = vpop.permute.xlu0 %279
    %282 = vst.msk [vmem:[#allocation2 + $0x8] sm:$0xff] %vm94, %v280
    %v283 = vld [vmem:[%s261] sm:$0xff]
    %285 = vrot.lane.b32.xlu0 %v283, 124
    %v286 = vpop.permute.xlu0 %285
    %288 = vst.msk [vmem:[#allocation2 + $0x10] sm:$0xff] %vm101, %v286
    %v289 = vld [vmem:[%s264] sm:$0xff]
    %291 = vrot.lane.b32.xlu0 %v289, 12
    %v292 = vpop.permute.xlu0 %291
    %294 = vst.msk [vmem:[#allocation2 + $0x10] sm:$0xff] %vm108, %v292
    %v295 = vld [vmem:[#allocation9] sm:$0xff]
    %v296 = vld [vmem:[#allocation9 + $0x8] sm:$0xff]
    %v297 = vld [vmem:[#allocation2] sm:$0xff]
    %v298 = vld [vmem:[#allocation2 + $0x8] sm:$0xff]
    %v299 = vld [vmem:[#allocation2 + $0x10] sm:$0xff]
    %v300 = vld [vmem:[%s3] sm:$0xff]
    %v301 = vld [vmem:[%s3 + $0x8] sm:$0xff]
    %303 = vset.pattern.permute.xlu0 0
    %304 = vperm.xlu0 %303, %v300
    %v305 = vpop.permute.xlu0 %304
    %308 = vset.pattern.permute.xlu0 0
    %309 = vperm.xlu0 %308, %v301
    %v310 = vpop.permute.xlu0 %309
    %v313 = vsel %vm127, %v295, 0
    %v316 = vsel %vm127, %v296, 0
    %318 = vmatpush.msra.mxu0 0.0
    %319 = vmatpush.msra.mxu0 0.0
    %320 = vmatpush.msra.mxu0 0.0
    %321 = vmatpush.msra.mxu0 0.0
    %322 = vmatpush.msra.mxu0 0.0
    %323 = vmatpush.msra.mxu0 0.0
    %324 = vmatpush.msra.mxu0 0.0
    %325 = vmatpush.msra.mxu0 0.0
    %326 = vmatpush.msra.mxu0 0.0
    %327 = vmatpush.msra.mxu0 0.0
    %328 = vmatpush.msra.mxu0 0.0
    %329 = vmatpush.msra.mxu0 0.0
    %330 = vmatpush.msra.mxu0 0.0
    %331 = vmatpush.msra.mxu0 %v299
    %332 = vmatpush.msra.mxu0 %v298
    %333 = vmatpush.msra.mxu0 %v297
    %334 = vmatmul.f32.gmra.mxu0 %v313
    %v335 = vpop.f32.mrf.mxu0
    %v336 = vadd.f32 %v305, %v335
    %337 = vmatmul.f32.gmra.mxu0 %v316
    %v338 = vpop.f32.mrf.mxu0
    %v339 = vadd.f32 %v310, %v338
    %340 = vdwg.mxu0
    %v341 = vmax.f32 %v336, 0.0
    %342 = vst.msk [vmem:[#allocation3] sm:$0xff] %vm158, %v341
    %343 = vst.msk [vmem:[#allocation3 + $0x8] sm:$0xff] %vm73, %v339
    // Predicated region
    $region42: #{tpu_custom_call.1} parent=1 // pred_check
      %p344 = pneg %p71
    $region43: #{tpu_custom_call.1} parent=1 // pred_check_branch
      %346 = sbr.rel (%p344) target = $region45
    $region44: #{tpu_custom_call.1} parent=1 // pred_region
      %347 = vst.msk [vmem:[#allocation3] sm:$0xff] %vm80, 0.0
    $region45: #{tpu_custom_call.1} parent=1 // pred_fallthru
      _
    %v348 = vld [vmem:[%s4] sm:$0xff]
    %v349 = vld [vmem:[#allocation3] sm:$0xff]
    %v350 = vld [vmem:[%s167] sm:$0xff]
    %352 = vrot.lane.b32.xlu0 %v349, 126
    %v353 = vpop.permute.xlu0 %352
    %v356 = vsel %vm173, %v350, 0
    %358 = vmatpush.msra.mxu0 0.0
    %359 = vmatpush.msra.mxu0 0.0
    %360 = vmatpush.msra.mxu0 0.0
    %361 = vmatpush.msra.mxu0 0.0
    %362 = vmatpush.msra.mxu0 0.0
    %363 = vmatpush.msra.mxu0 0.0
    %364 = vmatpush.msra.mxu0 0.0
    %365 = vmatpush.msra.mxu0 0.0
    %366 = vmatpush.msra.mxu0 0.0
    %367 = vmatpush.msra.mxu0 0.0
    %368 = vmatpush.msra.mxu0 0.0
    %369 = vmatpush.msra.mxu0 0.0
    %370 = vmatpush.msra.mxu0 0.0
    %371 = vmatpush.msra.mxu0 0.0
    %372 = vmatpush.msra.mxu0 0.0
    %373 = vmatpush.msra.mxu0 %v353
    %374 = vmatmul.f32.gmra.mxu0 %v356
    %v375 = vpop.f32.mrf.mxu0
    %v376 = vadd.f32 0.0, %v375
    %377 = vdwg.mxu0
    %v379 = vsel %vm173, %v348, 0
    %381 = vmatpush.msra.mxu0 0.0
    %382 = vmatpush.msra.mxu0 0.0
    %383 = vmatpush.msra.mxu0 0.0
    %384 = vmatpush.msra.mxu0 0.0
    %385 = vmatpush.msra.mxu0 0.0
    %386 = vmatpush.msra.mxu0 0.0
    %387 = vmatpush.msra.mxu0 0.0
    %388 = vmatpush.msra.mxu0 0.0
    %389 = vmatpush.msra.mxu0 0.0
    %390 = vmatpush.msra.mxu0 0.0
    %391 = vmatpush.msra.mxu0 0.0
    %392 = vmatpush.msra.mxu0 0.0
    %393 = vmatpush.msra.mxu0 0.0
    %394 = vmatpush.msra.mxu0 0.0
    %395 = vmatpush.msra.mxu0 0.0
    %396 = vmatpush.msra.mxu0 %v349
    %397 = vmatmul.f32.gmra.mxu0 %v379
    %v398 = vpop.f32.mrf.mxu0
    %v399 = vadd.f32 %v376, %v398
    %400 = vdwg.mxu0
    %v401 = vld [vmem:[%s220] sm:$0xff]
    %402 = vrot.lane.b32.xlu0 %v349, 124
    %v403 = vpop.permute.xlu0 %402
    %v406 = vsel %vm173, %v401, 0
    %408 = vmatpush.msra.mxu0 0.0
    %409 = vmatpush.msra.mxu0 0.0
    %410 = vmatpush.msra.mxu0 0.0
    %411 = vmatpush.msra.mxu0 0.0
    %412 = vmatpush.msra.mxu0 0.0
    %413 = vmatpush.msra.mxu0 0.0
    %414 = vmatpush.msra.mxu0 0.0
    %415 = vmatpush.msra.mxu0 0.0
    %416 = vmatpush.msra.mxu0 0.0
    %417 = vmatpush.msra.mxu0 0.0
    %418 = vmatpush.msra.mxu0 0.0
    %419 = vmatpush.msra.mxu0 0.0
    %420 = vmatpush.msra.mxu0 0.0
    %421 = vmatpush.msra.mxu0 0.0
    %422 = vmatpush.msra.mxu0 0.0
    %423 = vmatpush.msra.mxu0 %v403
    %424 = vmatmul.f32.gmra.mxu0 %v406
    %v425 = vpop.f32.mrf.mxu0
    %v426 = vadd.f32 0.0, %v425
    %427 = vdwg.mxu0
    %v428 = vadd.f32 %v399, %v426
    %v429 = vld [vmem:[%s5] sm:$0xff]
    %431 = vset.pattern.permute.xlu0 0
    %432 = vperm.xlu0 %431, %v429
    %v433 = vpop.permute.xlu0 %432
    %v435 = vadd.f32 %v428, %v433
    %v436 = vmax.f32 %v435, 0.0
    %v437 = vld [vmem:[#allocation3 + $0x8] sm:$0xff]
    %v438 = vadd.f32 %v436, %v437
    %v439 = vmax.f32 %v438, 0.0
    %s440 = scalar_lea.vmem [#allocation10], 8
    %441 = vst.msk [vmem:[%s440] sm:$0xff] %vm73, %v439
    // Predicated region
    $region46: #{tpu_custom_call.1} parent=1 // pred_check
      _
    $region47: #{tpu_custom_call.1} parent=1 // pred_check_branch
      %443 = sbr.rel (0) target = $region49
    $region48: #{tpu_custom_call.1} parent=1 // pred_region
      %445 = vsyncadd [#allocation6], 0
      %s446 = sshll.u32 [#allocation10], 4
      %s447 = int_to_ptr.vmem [resolvable:$true] %s446
      %s448 = sshll.u32 %s6, 4
      %s449 = int_to_ptr.hbm [resolvable:$true] %s448
      %454 = dma.vmem_to_hbm [thread:$0]  %s447, 256, %s449, [#allocation6], 128, 128, 8
    $region49: #{tpu_custom_call.1} parent=1 // pred_fallthru
      _
    // Predicated region
    $region50: #{tpu_custom_call.1} parent=1 // pred_check
      _
    $region51: #{tpu_custom_call.1} parent=1 // pred_check_branch
      %456 = sbr.rel (0) target = $region53
    $region52: #{tpu_custom_call.1} parent=1 // pred_region
      %458 = dma.done [#allocation6], 256
    $region53: #{tpu_custom_call.1} parent=1 // pred_fallthru
      _
    %459 = vsyncpa [#allocation5], 1
    %460 = vsyncpa [#allocation8], 1
    %461 = vsyncpa [#allocation6], 1

</llo_original>
